<compile_context>
chip_gen: v5e
topology: v5e:2x2
jax: 0.10.0
libtpu: 0.0.40
codegen_flags: <defaults>
</compile_context>

<pallas_src>
import jax
import jax.numpy as jnp
from jax.experimental import pallas as pl
from jax.experimental.pallas import tpu as pltpu


# Layer dims of NeuralNetwork_8_16_32_16_8: 8 -> 16 -> 32 -> 16 -> 8
LAYER_DIMS = [(8, 16), (16, 32), (32, 16), (16, 8)]   # (in_features, out_features)
_B_OFF = (0, 16, 48, 64, 72)                          # cumulative bias offsets (x8 aligned)


def mlp_kernel(xT_ref, w1_ref, w2_ref, w3_ref, w4_ref, b_ref, oT_ref):
    """Whole MLP fused on one batch tile: 4 matmuls + 3 ReLUs + bias adds."""
    xT = xT_ref[...]                     # (8, TB) f32, batch on lanes
    b = b_ref[...]                       # (72, 1) all four biases concatenated
    b1 = b[_B_OFF[0]:_B_OFF[1]]          # (16, 1)
    b2 = b[_B_OFF[1]:_B_OFF[2]]          # (32, 1)
    b3 = b[_B_OFF[2]:_B_OFF[3]]          # (16, 1)
    b4 = b[_B_OFF[3]:_B_OFF[4]]          # (8, 1)

    h1 = jnp.dot(w1_ref[...], xT, preferred_element_type=jnp.float32) + b1
    h1 = jnp.maximum(h1, 0.0)            # (16, TB)
    h2 = jnp.dot(w2_ref[...], h1, preferred_element_type=jnp.float32) + b2
    h2 = jnp.maximum(h2, 0.0)            # (32, TB)
    h3 = jnp.dot(w3_ref[...], h2, preferred_element_type=jnp.float32) + b3
    h3 = jnp.maximum(h3, 0.0)            # (16, TB)
    oT_ref[...] = jnp.dot(w4_ref[...], h3, preferred_element_type=jnp.float32) + b4


def _round_up(n, m):
    return pl.cdiv(n, m) * m


def mlp_forward(x, params, *, batch_tile=512):
    """x: (B, 8) float32. params: torch-layout weights (out, in), biases (out,)."""
    B, in_features = x.shape
    out_features = params["w4"].shape[0]

    # Batch tile: multiple of 128 (lane width), large enough to amortize the
    # ~0.35 us per-grid-step overhead; an (8, 512) f32 tile is only 16 KiB, so
    # double-buffered tiles + resident weights stay far under the scoped-VMEM
    # limit on every generation (v5e/v6e/v7x) — no vmem_limit_bytes needed.
    TB = min(batch_tile, _round_up(B, 128))
    B_pad = _round_up(B, TB)

    xT = x.T                                              # (8, B): batch -> lanes
    if B_pad != B:
        xT = jnp.pad(xT, ((0, 0), (0, B_pad - B)))        # zero-pad extra columns

    # Merge the four tiny bias vectors into a single resident (72, 1) operand.
    b_all = jnp.concatenate(
        [params["b1"], params["b2"], params["b3"], params["b4"]]
    )[:, None].astype(jnp.float32)

    grid = (B_pad // TB,)
    const = lambda i: (0, 0)  # weights/biases: same block every step -> not re-DMA'd

    outT = pl.pallas_call(
        mlp_kernel,
        out_shape=jax.ShapeDtypeStruct((out_features, B_pad), jnp.float32),
        grid=grid,
        in_specs=[
            pl.BlockSpec((in_features, TB), lambda i: (0, i)),   # xT batch tile
            pl.BlockSpec(params["w1"].shape, const),             # (16, 8)
            pl.BlockSpec(params["w2"].shape, const),             # (32, 16)
            pl.BlockSpec(params["w3"].shape, const),             # (16, 32)
            pl.BlockSpec(params["w4"].shape, const),             # (8, 16)
            pl.BlockSpec(b_all.shape, const),                    # (72, 1)
        ],
        out_specs=pl.BlockSpec((out_features, TB), lambda i: (0, i)),
        compiler_params=pltpu.CompilerParams(
            dimension_semantics=("parallel",),   # batch tiles across v7x TCs
        ),
    )(xT, params["w1"], params["w2"], params["w3"], params["w4"], b_all)

    return outT[:, :B].T                                  # back to (B, 8)


def init_params(key):
    """Deterministic init with exact nn.Linear shapes/convention:
       w_i: (out_features, in_features), b_i: (out_features,)."""
    params = {}
    for i, (fan_in, fan_out) in enumerate(LAYER_DIMS, start=1):
        key, kw, kb = jax.random.split(key, 3)
        bound = 1.0 / jnp.sqrt(fan_in)  # torch default U(-1/sqrt(fan_in), +)
        params[f"w{i}"] = jax.random.uniform(kw, (fan_out, fan_in), jnp.float32,
                                             -bound, bound)
        params[f"b{i}"] = jax.random.uniform(kb, (fan_out,), jnp.float32,
                                             -bound, bound)
    return params


def mlp_reference(x, params):
    h = x
    for i in range(1, 5):
        h = h @ params[f"w{i}"].T + params[f"b{i}"]
        if i < 4:
            h = jnp.maximum(h, 0.0)
    return h


if __name__ == "__main__":
    key = jax.random.PRNGKey(0)
    key, kx = jax.random.split(key)

    # Non-multiple-of-tile batch to exercise the grid (2 steps) + padding path.
    batch = 1000
    x = jax.random.normal(kx, (batch, 8), dtype=jnp.float32)
    params = init_params(key)

    out = jax.block_until_ready(mlp_forward(x, params))
    ref = mlp_reference(x, params)

    assert out.shape == (batch, 8)
    max_err = float(jnp.max(jnp.abs(out - ref)))
    assert jnp.allclose(out, ref, atol=2e-5, rtol=2e-5), f"max_err={max_err}"

    print("KERNEL_OK")
</pallas_src>

<mosaic_0001>
module attributes {stable_mosaic.version = 11 : i64} {
  func.func @mlp_kernel(%arg0: i32, %arg1: memref<8x512xf32, #tpu.memory_space<vmem>>, %arg2: memref<16x8xf32, #tpu.memory_space<vmem>>, %arg3: memref<32x16xf32, #tpu.memory_space<vmem>>, %arg4: memref<16x32xf32, #tpu.memory_space<vmem>>, %arg5: memref<8x16xf32, #tpu.memory_space<vmem>>, %arg6: memref<72x1xf32, #tpu.memory_space<vmem>>, %arg7: memref<8x512xf32, #tpu.memory_space<vmem>>) attributes {dimension_semantics = [#tpu.dimension_semantics<parallel>], iteration_bounds = array<i64: 2>, scalar_prefetch = 0 : i64, scratch_operands = 0 : i64, tpu.core_type = #tpu.core_type<tc>, window_params = [{transform_indices = @transform_0, window_bounds = array<i64: 8, 512>}, {pipeline_mode = #tpu.pipeline_mode<synchronous>, transform_indices = @transform_1, window_bounds = array<i64: 16, 8>}, {pipeline_mode = #tpu.pipeline_mode<synchronous>, transform_indices = @transform_2, window_bounds = array<i64: 32, 16>}, {pipeline_mode = #tpu.pipeline_mode<synchronous>, transform_indices = @transform_3, window_bounds = array<i64: 16, 32>}, {pipeline_mode = #tpu.pipeline_mode<synchronous>, transform_indices = @transform_4, window_bounds = array<i64: 8, 16>}, {pipeline_mode = #tpu.pipeline_mode<synchronous>, transform_indices = @transform_5, window_bounds = array<i64: 72, 1>}, {transform_indices = @transform_6, window_bounds = array<i64: 8, 512>}]} {
    %c0 = arith.constant 0 : index
    %c0_0 = arith.constant 0 : index
    %0 = vector.load %arg1[%c0, %c0_0] : memref<8x512xf32, #tpu.memory_space<vmem>>, vector<8x512xf32>
    %c0_1 = arith.constant 0 : index
    %c0_2 = arith.constant 0 : index
    %1 = vector.load %arg6[%c0_1, %c0_2] : memref<72x1xf32, #tpu.memory_space<vmem>>, vector<72x1xf32>
    %2 = vector.extract_strided_slice %1 {offsets = [0, 0], sizes = [16, 1], strides = [1, 1]} : vector<72x1xf32> to vector<16x1xf32>
    %3 = vector.extract_strided_slice %1 {offsets = [16, 0], sizes = [32, 1], strides = [1, 1]} : vector<72x1xf32> to vector<32x1xf32>
    %4 = vector.extract_strided_slice %1 {offsets = [48, 0], sizes = [16, 1], strides = [1, 1]} : vector<72x1xf32> to vector<16x1xf32>
    %5 = vector.extract_strided_slice %1 {offsets = [64, 0], sizes = [8, 1], strides = [1, 1]} : vector<72x1xf32> to vector<8x1xf32>
    %c0_3 = arith.constant 0 : index
    %c0_4 = arith.constant 0 : index
    %6 = vector.load %arg2[%c0_3, %c0_4] : memref<16x8xf32, #tpu.memory_space<vmem>>, vector<16x8xf32>
    %cst = arith.constant dense<0.000000e+00> : vector<16x512xf32>
    %7 = tpu.matmul %6, %0, %cst {dimension_numbers = #tpu.dot_dimension_numbers<[1], [0], [0], [1], [0, 0, 1, 1], [], []>} : vector<16x8xf32>, vector<8x512xf32>, vector<16x512xf32> -> vector<16x512xf32>
    %8 = vector.broadcast %2 : vector<16x1xf32> to vector<16x512xf32>
    %9 = arith.addf %7, %8 : vector<16x512xf32>
    %cst_5 = arith.constant 0.000000e+00 : f32
    %10 = vector.broadcast %cst_5 : f32 to vector<16x512xf32>
    %11 = arith.maximumf %9, %10 : vector<16x512xf32>
    %c0_6 = arith.constant 0 : index
    %c0_7 = arith.constant 0 : index
    %12 = vector.load %arg3[%c0_6, %c0_7] : memref<32x16xf32, #tpu.memory_space<vmem>>, vector<32x16xf32>
    %cst_8 = arith.constant dense<0.000000e+00> : vector<32x512xf32>
    %13 = tpu.matmul %12, %11, %cst_8 {dimension_numbers = #tpu.dot_dimension_numbers<[1], [0], [0], [1], [0, 0, 1, 1], [], []>} : vector<32x16xf32>, vector<16x512xf32>, vector<32x512xf32> -> vector<32x512xf32>
    %14 = vector.broadcast %3 : vector<32x1xf32> to vector<32x512xf32>
    %15 = arith.addf %13, %14 : vector<32x512xf32>
    %cst_9 = arith.constant 0.000000e+00 : f32
    %16 = vector.broadcast %cst_9 : f32 to vector<32x512xf32>
    %17 = arith.maximumf %15, %16 : vector<32x512xf32>
    %c0_10 = arith.constant 0 : index
    %c0_11 = arith.constant 0 : index
    %18 = vector.load %arg4[%c0_10, %c0_11] : memref<16x32xf32, #tpu.memory_space<vmem>>, vector<16x32xf32>
    %cst_12 = arith.constant dense<0.000000e+00> : vector<16x512xf32>
    %19 = tpu.matmul %18, %17, %cst_12 {dimension_numbers = #tpu.dot_dimension_numbers<[1], [0], [0], [1], [0, 0, 1, 1], [], []>} : vector<16x32xf32>, vector<32x512xf32>, vector<16x512xf32> -> vector<16x512xf32>
    %20 = vector.broadcast %4 : vector<16x1xf32> to vector<16x512xf32>
    %21 = arith.addf %19, %20 : vector<16x512xf32>
    %cst_13 = arith.constant 0.000000e+00 : f32
    %22 = vector.broadcast %cst_13 : f32 to vector<16x512xf32>
    %23 = arith.maximumf %21, %22 : vector<16x512xf32>
    %c0_14 = arith.constant 0 : index
    %c0_15 = arith.constant 0 : index
    %24 = vector.load %arg5[%c0_14, %c0_15] : memref<8x16xf32, #tpu.memory_space<vmem>>, vector<8x16xf32>
    %cst_16 = arith.constant dense<0.000000e+00> : vector<8x512xf32>
    %25 = tpu.matmul %24, %23, %cst_16 {dimension_numbers = #tpu.dot_dimension_numbers<[1], [0], [0], [1], [0, 0, 1, 1], [], []>} : vector<8x16xf32>, vector<16x512xf32>, vector<8x512xf32> -> vector<8x512xf32>
    %26 = vector.broadcast %5 : vector<8x1xf32> to vector<8x512xf32>
    %27 = arith.addf %25, %26 : vector<8x512xf32>
    %c0_17 = arith.constant 0 : index
    %c0_18 = arith.constant 0 : index
    %28 = vector.load %arg7[%c0_17, %c0_18] : memref<8x512xf32, #tpu.memory_space<vmem>>, vector<8x512xf32>
    tpu.vector_store %arg7[%c0_17, %c0_18], %27 {strides = array<i32>} : memref<8x512xf32, #tpu.memory_space<vmem>>, vector<8x512xf32>,
    return
  }
  func.func @transform_0(%arg0: i32) -> (i32, i32) {
    %c0_i32 = arith.constant 0 : i32
    %c0_i32_0 = arith.constant 0 : i32
    return %c0_i32, %arg0 : i32, i32
  }
  func.func @transform_1(%arg0: i32) -> (i32, i32) {
    %c0_i32 = arith.constant 0 : i32
    %c0_i32_0 = arith.constant 0 : i32
    %c0_i32_1 = arith.constant 0 : i32
    return %c0_i32, %c0_i32_0 : i32, i32
  }
  func.func @transform_2(%arg0: i32) -> (i32, i32) {
    %c0_i32 = arith.constant 0 : i32
    %c0_i32_0 = arith.constant 0 : i32
    %c0_i32_1 = arith.constant 0 : i32
    return %c0_i32, %c0_i32_0 : i32, i32
  }
  func.func @transform_3(%arg0: i32) -> (i32, i32) {
    %c0_i32 = arith.constant 0 : i32
    %c0_i32_0 = arith.constant 0 : i32
    %c0_i32_1 = arith.constant 0 : i32
    return %c0_i32, %c0_i32_0 : i32, i32
  }
  func.func @transform_4(%arg0: i32) -> (i32, i32) {
    %c0_i32 = arith.constant 0 : i32
    %c0_i32_0 = arith.constant 0 : i32
    %c0_i32_1 = arith.constant 0 : i32
    return %c0_i32, %c0_i32_0 : i32, i32
  }
  func.func @transform_5(%arg0: i32) -> (i32, i32) {
    %c0_i32 = arith.constant 0 : i32
    %c0_i32_0 = arith.constant 0 : i32
    %c0_i32_1 = arith.constant 0 : i32
    return %c0_i32, %c0_i32_0 : i32, i32
  }
  func.func @transform_6(%arg0: i32) -> (i32, i32) {
    %c0_i32 = arith.constant 0 : i32
    %c0_i32_0 = arith.constant 0 : i32
    return %c0_i32, %arg0 : i32, i32
  }
}

</mosaic_0001>

<llo_original>
// kernel: tpu_custom_call.1
$region0: #{tpu_custom_call.1}
  #allocation0 [shape = 'u32[]', space=smem, size = 0x4, offset = 0x4, fixed_abs, tag = 'smem constant byte address 0x4 - core index']
  #allocation1 [shape = 'u32[72,128]{1,0:T(1,128)}', space=vmem, size = 0x9000, scoped, tag = 'internal scratch']
  %s0 = inlined_call_operand.vmem [shape: f32[8,1024], index: 0, kind: input, shape index: {}]
  %s1 = inlined_call_operand.vmem [shape: f32[16,8], index: 1, kind: input, shape index: {}]
  %s2 = inlined_call_operand.vmem [shape: f32[32,16], index: 2, kind: input, shape index: {}]
  %s3 = inlined_call_operand.vmem [shape: f32[16,32], index: 3, kind: input, shape index: {}]
  %s4 = inlined_call_operand.vmem [shape: f32[8,16], index: 4, kind: input, shape index: {}]
  %s5 = inlined_call_operand.vmem [shape: f32[72,1], index: 5, kind: input, shape index: {}]
  %s6 = inlined_call_operand.hbm [shape: f32[8,1024], index: 6, kind: output, shape index: {}]
  %s7 = sld [smem:[#allocation0]]
  $region57: #{tpu_custom_call.1} parent=0
    _
  %s9 = ssub.s32 1, %s7
  %s10 = scalar_select 0, %s9, %s7
  $region1: #{tpu_custom_call.1} parent=0
    #allocation2 [shape = 'u8[32768]{0}', space=vmem, size = 0x8000, scoped, tag = 'output window, operand 0']
    #allocation3 [shape = 's32[2]{0}', space=sflag, size = 0x8, scoped, tag = 'scoped memory for tpu_custom_call.1']
    %11 = vsyncpa [#allocation3], 0
    %s12 = scalar_lea.sflag [#allocation3], 1
    %13 = vsyncpa %s12, 0
    loop: start=0, step=1, limit=4
    $region2: #{tpu_custom_call.1} parent=1 // loop_pre_header
      _
    $region3: #{tpu_custom_call.1} parent=1 // loop_header
      %s15 = sphi 0, %s19
      %p16 = scmp.ge.s32.totalorder %s15, 4
      %s25 = sphi 0, %s27
      %s28 = sphi 0, %s25
      %s29 = sphi 0, %s28
      %s45 = sphi 0, %s29
      %s49 = sphi 0, %s49
      %s51 = sphi 0, %s49
      %s52 = sphi 0, %s51
      %s66 = sphi 0, %s52
      %s70 = sphi 0, %s70
      %s72 = sphi 0, %s70
      %s73 = sphi 0, %s72
      %s87 = sphi 0, %s73
      %s91 = sphi 0, %s91
      %s93 = sphi 0, %s91
      %s94 = sphi 0, %s93
      %s108 = sphi 0, %s94
      %s112 = sphi 0, %s112
      %s114 = sphi 0, %s112
      %s115 = sphi 0, %s114
      %s129 = sphi 0, %s115
      %s133 = sphi 0, %s133
      %s135 = sphi 0, %s133
      %s136 = sphi 0, %s135
      %s150 = sphi 0, %s136
      %s156 = sphi 0, %s158
      %s159 = sphi 0, %s156
      %s160 = sphi 0, %s159
      %s176 = sphi 0, %s160
    $region4: #{tpu_custom_call.1} parent=1 // loop_header_branch
      %18 = sbr.rel (%p16) target = $region8
    $region5: #{tpu_custom_call.1} parent=1 // loop_body
      %s20 = ssub.s32 %s15, 1
      %s21 = ssub.s32 %s15, 2
      %s22 = sadd.s32 %s15, 1
      %s23 = ssub.s32 %s15, %s22
      %p24 = scmp.eq.s32.totalorder %s23, 0
      %s26 = sadd.s32 %s25, 1
      %s27 = scalar_select %p24, %s25, %s26
      %p30 = pneg %p24
      %p31 = scmp.eq.s32.totalorder %s15, 1
      %p32 = por %p30, %p31
      %p33 = scmp.ne.s32.totalorder %s25, %s28
      %p34 = scmp.eq.s32.totalorder %s15, 0
      %p35 = por %p33, %p34
      %p36 = scmp.ne.s32.totalorder %s25, %s28
      %p37 = scmp.eq.s32.totalorder %s20, 1
      %p38 = por %p36, %p37
      %p39 = scmp.ne.s32.totalorder %s28, %s29
      %p40 = scmp.eq.s32.totalorder %s20, 0
      %p41 = por %p39, %p40
      %p42 = scmp.ne.s32.totalorder %s28, %s29
      %p43 = scmp.eq.s32.totalorder %s21, 1
      %p44 = por %p42, %p43
      %p46 = scmp.ne.s32.totalorder %s29, %s45
      %p47 = scmp.eq.s32.totalorder %s21, 0
      %p48 = por %p46, %p47
      %s50 = sadd.s32 %s49, 1
      %p53 = scmp.eq.s32.totalorder %s15, 1
      %p54 = scmp.ne.s32.totalorder %s49, %s51
      %p55 = scmp.eq.s32.totalorder %s15, 0
      %p56 = por %p54, %p55
      %p57 = scmp.ne.s32.totalorder %s49, %s51
      %p58 = scmp.eq.s32.totalorder %s20, 1
      %p59 = por %p57, %p58
      %p60 = scmp.ne.s32.totalorder %s51, %s52
      %p61 = scmp.eq.s32.totalorder %s20, 0
      %p62 = por %p60, %p61
      %p63 = scmp.ne.s32.totalorder %s51, %s52
      %p64 = scmp.eq.s32.totalorder %s21, 1
      %p65 = por %p63, %p64
      %p67 = scmp.ne.s32.totalorder %s52, %s66
      %p68 = scmp.eq.s32.totalorder %s21, 0
      %p69 = por %p67, %p68
      %s71 = sadd.s32 %s70, 1
      %p74 = scmp.eq.s32.totalorder %s15, 1
      %p75 = scmp.ne.s32.totalorder %s70, %s72
      %p76 = scmp.eq.s32.totalorder %s15, 0
      %p77 = por %p75, %p76
      %p78 = scmp.ne.s32.totalorder %s70, %s72
      %p79 = scmp.eq.s32.totalorder %s20, 1
      %p80 = por %p78, %p79
      %p81 = scmp.ne.s32.totalorder %s72, %s73
      %p82 = scmp.eq.s32.totalorder %s20, 0
      %p83 = por %p81, %p82
      %p84 = scmp.ne.s32.totalorder %s72, %s73
      %p85 = scmp.eq.s32.totalorder %s21, 1
      %p86 = por %p84, %p85
      %p88 = scmp.ne.s32.totalorder %s73, %s87
      %p89 = scmp.eq.s32.totalorder %s21, 0
      %p90 = por %p88, %p89
      %s92 = sadd.s32 %s91, 1
      %p95 = scmp.eq.s32.totalorder %s15, 1
      %p96 = scmp.ne.s32.totalorder %s91, %s93
      %p97 = scmp.eq.s32.totalorder %s15, 0
      %p98 = por %p96, %p97
      %p99 = scmp.ne.s32.totalorder %s91, %s93
      %p100 = scmp.eq.s32.totalorder %s20, 1
      %p101 = por %p99, %p100
      %p102 = scmp.ne.s32.totalorder %s93, %s94
      %p103 = scmp.eq.s32.totalorder %s20, 0
      %p104 = por %p102, %p103
      %p105 = scmp.ne.s32.totalorder %s93, %s94
      %p106 = scmp.eq.s32.totalorder %s21, 1
      %p107 = por %p105, %p106
      %p109 = scmp.ne.s32.totalorder %s94, %s108
      %p110 = scmp.eq.s32.totalorder %s21, 0
      %p111 = por %p109, %p110
      %s113 = sadd.s32 %s112, 1
      %p116 = scmp.eq.s32.totalorder %s15, 1
      %p117 = scmp.ne.s32.totalorder %s112, %s114
      %p118 = scmp.eq.s32.totalorder %s15, 0
      %p119 = por %p117, %p118
      %p120 = scmp.ne.s32.totalorder %s112, %s114
      %p121 = scmp.eq.s32.totalorder %s20, 1
      %p122 = por %p120, %p121
      %p123 = scmp.ne.s32.totalorder %s114, %s115
      %p124 = scmp.eq.s32.totalorder %s20, 0
      %p125 = por %p123, %p124
      %p126 = scmp.ne.s32.totalorder %s114, %s115
      %p127 = scmp.eq.s32.totalorder %s21, 1
      %p128 = por %p126, %p127
      %p130 = scmp.ne.s32.totalorder %s115, %s129
      %p131 = scmp.eq.s32.totalorder %s21, 0
      %p132 = por %p130, %p131
      %s134 = sadd.s32 %s133, 1
      %p137 = scmp.eq.s32.totalorder %s15, 1
      %p138 = scmp.ne.s32.totalorder %s133, %s135
      %p139 = scmp.eq.s32.totalorder %s15, 0
      %p140 = por %p138, %p139
      %p141 = scmp.ne.s32.totalorder %s133, %s135
      %p142 = scmp.eq.s32.totalorder %s20, 1
      %p143 = por %p141, %p142
      %p144 = scmp.ne.s32.totalorder %s135, %s136
      %p145 = scmp.eq.s32.totalorder %s20, 0
      %p146 = por %p144, %p145
      %p147 = scmp.ne.s32.totalorder %s135, %s136
      %p148 = scmp.eq.s32.totalorder %s21, 1
      %p149 = por %p147, %p148
      %p151 = scmp.ne.s32.totalorder %s136, %s150
      %p152 = scmp.eq.s32.totalorder %s21, 0
      %p153 = por %p151, %p152
      %s154 = ssub.s32 %s15, %s22
      %p155 = scmp.eq.s32.totalorder %s154, 0
      %s157 = sadd.s32 %s156, 1
      %s158 = scalar_select %p155, %s156, %s157
      %p161 = pneg %p155
      %p162 = scmp.eq.s32.totalorder %s15, 1
      %p163 = por %p161, %p162
      %p164 = scmp.ne.s32.totalorder %s156, %s159
      %p165 = scmp.eq.s32.totalorder %s15, 0
      %p166 = por %p164, %p165
      %p167 = scmp.ne.s32.totalorder %s156, %s159
      %p168 = scmp.eq.s32.totalorder %s20, 1
      %p169 = por %p167, %p168
      %p170 = scmp.ne.s32.totalorder %s159, %s160
      %p171 = scmp.eq.s32.totalorder %s20, 0
      %p172 = por %p170, %p171
      %p173 = scmp.ne.s32.totalorder %s159, %s160
      %p174 = scmp.eq.s32.totalorder %s21, 1
      %p175 = por %p173, %p174
      %p177 = scmp.ne.s32.totalorder %s160, %s176
      %p178 = scmp.eq.s32.totalorder %s21, 0
      %p179 = por %p177, %p178
      %p180 = scmp.le.s32.totalorder 1, %s15
      %p181 = scmp.lt.s32.totalorder %s15, 3
      %p182 = pnand %p180, %p181
      %p183 = pneg %p182
      // Predicated region
      $region9: #{tpu_custom_call.1} parent=5 // pred_check
        _
      $region10: #{tpu_custom_call.1} parent=5 // pred_check_branch
        %185 = sbr.rel (%p182) target = $region12
      $region11: #{tpu_custom_call.1} parent=5 // pred_region
        %s186 = ssub.s32 %s15, 1
        // Predicated region
        $region13: #{tpu_custom_call.1} parent=11 // pred_check
          %p187 = pneg %p62
        $region14: #{tpu_custom_call.1} parent=11 // pred_check_branch
          %189 = sbr.rel (%p187) target = $region16
        $region15: #{tpu_custom_call.1} parent=11 // pred_region
          _
        $region16: #{tpu_custom_call.1} parent=11 // pred_fallthru
          _
        // Predicated region
        $region17: #{tpu_custom_call.1} parent=11 // pred_check
          %p190 = pneg %p83
        $region18: #{tpu_custom_call.1} parent=11 // pred_check_branch
          %192 = sbr.rel (%p190) target = $region20
        $region19: #{tpu_custom_call.1} parent=11 // pred_region
          _
        $region20: #{tpu_custom_call.1} parent=11 // pred_fallthru
          _
        // Predicated region
        $region21: #{tpu_custom_call.1} parent=11 // pred_check
          %p193 = pneg %p104
        $region22: #{tpu_custom_call.1} parent=11 // pred_check_branch
          %195 = sbr.rel (%p193) target = $region24
        $region23: #{tpu_custom_call.1} parent=11 // pred_region
          _
        $region24: #{tpu_custom_call.1} parent=11 // pred_fallthru
          _
        // Predicated region
        $region25: #{tpu_custom_call.1} parent=11 // pred_check
          %p196 = pneg %p125
        $region26: #{tpu_custom_call.1} parent=11 // pred_check_branch
          %198 = sbr.rel (%p196) target = $region28
        $region27: #{tpu_custom_call.1} parent=11 // pred_region
          _
        $region28: #{tpu_custom_call.1} parent=11 // pred_fallthru
          _
        // Predicated region
        $region29: #{tpu_custom_call.1} parent=11 // pred_check
          %p199 = pneg %p146
        $region30: #{tpu_custom_call.1} parent=11 // pred_check_branch
          %201 = sbr.rel (%p199) target = $region32
        $region31: #{tpu_custom_call.1} parent=11 // pred_region
          _
        $region32: #{tpu_custom_call.1} parent=11 // pred_fallthru
          _
      $region12: #{tpu_custom_call.1} parent=5 // pred_fallthru
        _
      %p202 = scmp.lt.s32.totalorder %s15, 2
      // Predicated region
      $region33: #{tpu_custom_call.1} parent=5 // pred_check
        %p203 = pneg %p202
      $region34: #{tpu_custom_call.1} parent=5 // pred_check_branch
        %205 = sbr.rel (%p203) target = $region36
      $region35: #{tpu_custom_call.1} parent=5 // pred_region
        // Predicated region
        $region37: #{tpu_custom_call.1} parent=35 // pred_check
          %p206 = pneg %p35
        $region38: #{tpu_custom_call.1} parent=35 // pred_check_branch
          %208 = sbr.rel (%p206) target = $region40
        $region39: #{tpu_custom_call.1} parent=35 // pred_region
          %s209 = smul.u32 4, %s15
          %p210 = scmp.lt.s32.totalorder %s209, 7
          %s211 = scalar_select %p210, %s209, 7
          %s212 = smul.addr %s211, 8
          %s213 = scalar_lea.vmem %s0, %s212
          %s214 = smul.u32 4, %s15
        $region40: #{tpu_custom_call.1} parent=35 // pred_fallthru
          _
      $region36: #{tpu_custom_call.1} parent=5 // pred_fallthru
        _
      %p215 = scmp.le.s32.totalorder 1, %s15
      %p216 = scmp.lt.s32.totalorder %s15, 3
      %p217 = pnand %p215, %p216
      %p218 = pneg %p217
      // Predicated region
      $region41: #{tpu_custom_call.1} parent=5 // pred_check
        _
      $region42: #{tpu_custom_call.1} parent=5 // pred_check_branch
        %220 = sbr.rel (%p217) target = $region44
      $region43: #{tpu_custom_call.1} parent=5 // pred_region
        %s221 = ssub.s32 %s15, 1
        %s222 = smul.u32 4, %s20
        %p223 = scmp.lt.s32.totalorder %s222, 7
        %s224 = scalar_select %p223, %s222, 7
        %s225 = smul.addr %s224, 8
        %s226 = scalar_lea.vmem %s0, %s225
        %p227 = pneg %p41
        %p228 = pneg %p38
        %p229 = pneg %p62
        %p230 = pneg %p59
        %p231 = pneg %p83
        %p232 = pneg %p80
        %p233 = pneg %p104
        %p234 = pneg %p101
        %p235 = pneg %p125
        %p236 = pneg %p122
        %p237 = pneg %p146
        %p238 = pneg %p143
        %p239 = pneg %p172
        %p240 = pneg %p169
        %s241 = sand.u32 %s159, 1
        %s242 = scalar_lea.sflag [#allocation3], %s241
        %s243 = sand.u32 %s159, 1
        %s244 = smul.addr %s243, 32
        %s245 = scalar_lea.vmem [#allocation2], %s244
        %s246 = smul.u32 4, %s20
        %p247 = scmp.lt.s32.totalorder %s246, 7
        %s248 = scalar_select %p247, %s246, 7
        %s249 = smul.addr %s248, 8
        %s250 = scalar_lea.vmem %s0, %s249
        %s251 = smul.u32 4, %s20
        %s252 = smul.u32 4, %s20
        %v253 = vld [vmem:[%s250] sm:$0xff]
        %v254 = vld [vmem:[%s250 + $0x8] sm:$0xff]
        %v255 = vld [vmem:[%s250 + $0x10] sm:$0xff]
        %v256 = vld [vmem:[%s250 + $0x18] sm:$0xff]
        %v257 = vld [vmem:[%s5] sm:$0xff]
        %v258 = vld [vmem:[%s5 + $0x8] sm:$0xff]
        %v259 = vld [vmem:[%s5 + $0x10] sm:$0xff]
        %v260 = vld [vmem:[%s5 + $0x18] sm:$0xff]
        %v261 = vld [vmem:[%s5 + $0x20] sm:$0xff]
        %v262 = vld [vmem:[%s5 + $0x28] sm:$0xff]
        %v263 = vld [vmem:[%s5 + $0x30] sm:$0xff]
        %v264 = vld [vmem:[%s5 + $0x38] sm:$0xff]
        %v265 = vld [vmem:[%s5 + $0x40] sm:$0xff]
        %v266 = vld [vmem:[%s1] sm:$0xff]
        %v267 = vld [vmem:[%s1 + $0x8] sm:$0xff]
        %269 = vset.pattern.permute.xlu0 0
        %270 = vperm.xlu0 %269, %v257
        %v271 = vpop.permute.xlu0 %270
        %274 = vset.pattern.permute.xlu0 0
        %275 = vperm.xlu0 %274, %v258
        %v276 = vpop.permute.xlu0 %275
        %vm278 = vcmask 64512
        %v280 = vsel %vm278, %v266, 0
        %v283 = vsel %vm278, %v267, 0
        %285 = vmatpush.msra.mxu0 0.0
        %286 = vmatpush.msra.mxu0 0.0
        %287 = vmatpush.msra.mxu0 0.0
        %288 = vmatpush.msra.mxu0 0.0
        %289 = vmatpush.msra.mxu0 0.0
        %290 = vmatpush.msra.mxu0 0.0
        %291 = vmatpush.msra.mxu0 0.0
        %292 = vmatpush.msra.mxu0 0.0
        %293 = vmatpush.msra.mxu0 0.0
        %294 = vmatpush.msra.mxu0 0.0
        %295 = vmatpush.msra.mxu0 0.0
        %296 = vmatpush.msra.mxu0 0.0
        %297 = vmatpush.msra.mxu0 0.0
        %298 = vmatpush.msra.mxu0 0.0
        %299 = vmatpush.msra.mxu0 0.0
        %300 = vmatpush.msra.mxu0 %v253
        %301 = vmatmul.f32.gmra.mxu0 %v280
        %v302 = vpop.f32.mrf.mxu0
        %v303 = vadd.f32 %v271, %v302
        %304 = vmatmul.f32.gmra.mxu0 %v283
        %v305 = vpop.f32.mrf.mxu0
        %v306 = vadd.f32 %v276, %v305
        %307 = vdwg.mxu0
        %308 = vmatpush.msra.mxu0 0.0
        %309 = vmatpush.msra.mxu0 0.0
        %310 = vmatpush.msra.mxu0 0.0
        %311 = vmatpush.msra.mxu0 0.0
        %312 = vmatpush.msra.mxu0 0.0
        %313 = vmatpush.msra.mxu0 0.0
        %314 = vmatpush.msra.mxu0 0.0
        %315 = vmatpush.msra.mxu0 0.0
        %316 = vmatpush.msra.mxu0 0.0
        %317 = vmatpush.msra.mxu0 0.0
        %318 = vmatpush.msra.mxu0 0.0
        %319 = vmatpush.msra.mxu0 0.0
        %320 = vmatpush.msra.mxu0 0.0
        %321 = vmatpush.msra.mxu0 0.0
        %322 = vmatpush.msra.mxu0 0.0
        %323 = vmatpush.msra.mxu0 %v254
        %324 = vmatmul.f32.gmra.mxu0 %v280
        %v325 = vpop.f32.mrf.mxu0
        %v326 = vadd.f32 %v271, %v325
        %327 = vmatmul.f32.gmra.mxu0 %v283
        %v328 = vpop.f32.mrf.mxu0
        %v329 = vadd.f32 %v276, %v328
        %330 = vdwg.mxu0
        %331 = vmatpush.msra.mxu0 0.0
        %332 = vmatpush.msra.mxu0 0.0
        %333 = vmatpush.msra.mxu0 0.0
        %334 = vmatpush.msra.mxu0 0.0
        %335 = vmatpush.msra.mxu0 0.0
        %336 = vmatpush.msra.mxu0 0.0
        %337 = vmatpush.msra.mxu0 0.0
        %338 = vmatpush.msra.mxu0 0.0
        %339 = vmatpush.msra.mxu0 0.0
        %340 = vmatpush.msra.mxu0 0.0
        %341 = vmatpush.msra.mxu0 0.0
        %342 = vmatpush.msra.mxu0 0.0
        %343 = vmatpush.msra.mxu0 0.0
        %344 = vmatpush.msra.mxu0 0.0
        %345 = vmatpush.msra.mxu0 0.0
        %346 = vmatpush.msra.mxu0 %v255
        %347 = vmatmul.f32.gmra.mxu0 %v280
        %v348 = vpop.f32.mrf.mxu0
        %v349 = vadd.f32 %v271, %v348
        %350 = vmatmul.f32.gmra.mxu0 %v283
        %v351 = vpop.f32.mrf.mxu0
        %v352 = vadd.f32 %v276, %v351
        %353 = vdwg.mxu0
        %354 = vmatpush.msra.mxu0 0.0
        %355 = vmatpush.msra.mxu0 0.0
        %356 = vmatpush.msra.mxu0 0.0
        %357 = vmatpush.msra.mxu0 0.0
        %358 = vmatpush.msra.mxu0 0.0
        %359 = vmatpush.msra.mxu0 0.0
        %360 = vmatpush.msra.mxu0 0.0
        %361 = vmatpush.msra.mxu0 0.0
        %362 = vmatpush.msra.mxu0 0.0
        %363 = vmatpush.msra.mxu0 0.0
        %364 = vmatpush.msra.mxu0 0.0
        %365 = vmatpush.msra.mxu0 0.0
        %366 = vmatpush.msra.mxu0 0.0
        %367 = vmatpush.msra.mxu0 0.0
        %368 = vmatpush.msra.mxu0 0.0
        %369 = vmatpush.msra.mxu0 %v256
        %370 = vmatmul.f32.gmra.mxu0 %v280
        %v371 = vpop.f32.mrf.mxu0
        %v372 = vadd.f32 %v271, %v371
        %373 = vmatmul.f32.gmra.mxu0 %v283
        %v374 = vpop.f32.mrf.mxu0
        %v375 = vadd.f32 %v276, %v374
        %376 = vdwg.mxu0
        %v377 = vmax.f32 %v303, 0.0
        %v378 = vmax.f32 %v326, 0.0
        %v379 = vmax.f32 %v349, 0.0
        %v380 = vmax.f32 %v372, 0.0
        %v381 = vmax.f32 %v306, 0.0
        %v382 = vmax.f32 %v329, 0.0
        %v383 = vmax.f32 %v352, 0.0
        %v384 = vmax.f32 %v375, 0.0
        %v385 = vld [vmem:[%s2] sm:$0xff]
        %v386 = vld [vmem:[%s2 + $0x8] sm:$0xff]
        %v387 = vld [vmem:[%s2 + $0x10] sm:$0xff]
        %v388 = vld [vmem:[%s2 + $0x18] sm:$0xff]
        %390 = vset.pattern.permute.xlu0 0
        %391 = vperm.xlu0 %390, %v259
        %v392 = vpop.permute.xlu0 %391
        %395 = vset.pattern.permute.xlu0 0
        %396 = vperm.xlu0 %395, %v260
        %v397 = vpop.permute.xlu0 %396
        %400 = vset.pattern.permute.xlu0 0
        %401 = vperm.xlu0 %400, %v261
        %v402 = vpop.permute.xlu0 %401
        %405 = vset.pattern.permute.xlu0 0
        %406 = vperm.xlu0 %405, %v262
        %v407 = vpop.permute.xlu0 %406
        %vm409 = vcmask 130048
        %v411 = vsel %vm409, %v385, 0
        %v414 = vsel %vm409, %v386, 0
        %v417 = vsel %vm409, %v387, 0
        %v420 = vsel %vm409, %v388, 0
        %422 = vmatpush.msra.mxu0 0.0
        %423 = vmatpush.msra.mxu0 0.0
        %424 = vmatpush.msra.mxu0 0.0
        %425 = vmatpush.msra.mxu0 0.0
        %426 = vmatpush.msra.mxu0 0.0
        %427 = vmatpush.msra.mxu0 0.0
        %428 = vmatpush.msra.mxu0 0.0
        %429 = vmatpush.msra.mxu0 0.0
        %430 = vmatpush.msra.mxu0 0.0
        %431 = vmatpush.msra.mxu0 0.0
        %432 = vmatpush.msra.mxu0 0.0
        %433 = vmatpush.msra.mxu0 0.0
        %434 = vmatpush.msra.mxu0 0.0
        %435 = vmatpush.msra.mxu0 0.0
        %436 = vmatpush.msra.mxu0 %v381
        %437 = vmatpush.msra.mxu0 %v377
        %438 = vmatmul.f32.gmra.mxu0 %v411
        %v439 = vpop.f32.mrf.mxu0
        %v440 = vadd.f32 %v392, %v439
        %441 = vmatmul.f32.gmra.mxu0 %v414
        %v442 = vpop.f32.mrf.mxu0
        %v443 = vadd.f32 %v397, %v442
        %444 = vmatmul.f32.gmra.mxu0 %v417
        %v445 = vpop.f32.mrf.mxu0
        %v446 = vadd.f32 %v402, %v445
        %447 = vmatmul.f32.gmra.mxu0 %v420
        %v448 = vpop.f32.mrf.mxu0
        %v449 = vadd.f32 %v407, %v448
        %450 = vdwg.mxu0
        %451 = vmatpush.msra.mxu0 0.0
        %452 = vmatpush.msra.mxu0 0.0
        %453 = vmatpush.msra.mxu0 0.0
        %454 = vmatpush.msra.mxu0 0.0
        %455 = vmatpush.msra.mxu0 0.0
        %456 = vmatpush.msra.mxu0 0.0
        %457 = vmatpush.msra.mxu0 0.0
        %458 = vmatpush.msra.mxu0 0.0
        %459 = vmatpush.msra.mxu0 0.0
        %460 = vmatpush.msra.mxu0 0.0
        %461 = vmatpush.msra.mxu0 0.0
        %462 = vmatpush.msra.mxu0 0.0
        %463 = vmatpush.msra.mxu0 0.0
        %464 = vmatpush.msra.mxu0 0.0
        %465 = vmatpush.msra.mxu0 %v382
        %466 = vmatpush.msra.mxu0 %v378
        %467 = vmatmul.f32.gmra.mxu0 %v411
        %v468 = vpop.f32.mrf.mxu0
        %v469 = vadd.f32 %v392, %v468
        %470 = vmatmul.f32.gmra.mxu0 %v414
        %v471 = vpop.f32.mrf.mxu0
        %v472 = vadd.f32 %v397, %v471
        %473 = vmatmul.f32.gmra.mxu0 %v417
        %v474 = vpop.f32.mrf.mxu0
        %v475 = vadd.f32 %v402, %v474
        %476 = vmatmul.f32.gmra.mxu0 %v420
        %v477 = vpop.f32.mrf.mxu0
        %v478 = vadd.f32 %v407, %v477
        %479 = vdwg.mxu0
        %480 = vmatpush.msra.mxu0 0.0
        %481 = vmatpush.msra.mxu0 0.0
        %482 = vmatpush.msra.mxu0 0.0
        %483 = vmatpush.msra.mxu0 0.0
        %484 = vmatpush.msra.mxu0 0.0
        %485 = vmatpush.msra.mxu0 0.0
        %486 = vmatpush.msra.mxu0 0.0
        %487 = vmatpush.msra.mxu0 0.0
        %488 = vmatpush.msra.mxu0 0.0
        %489 = vmatpush.msra.mxu0 0.0
        %490 = vmatpush.msra.mxu0 0.0
        %491 = vmatpush.msra.mxu0 0.0
        %492 = vmatpush.msra.mxu0 0.0
        %493 = vmatpush.msra.mxu0 0.0
        %494 = vmatpush.msra.mxu0 %v383
        %495 = vmatpush.msra.mxu0 %v379
        %496 = vmatmul.f32.gmra.mxu0 %v411
        %v497 = vpop.f32.mrf.mxu0
        %v498 = vadd.f32 %v392, %v497
        %499 = vmatmul.f32.gmra.mxu0 %v414
        %v500 = vpop.f32.mrf.mxu0
        %v501 = vadd.f32 %v397, %v500
        %502 = vmatmul.f32.gmra.mxu0 %v417
        %v503 = vpop.f32.mrf.mxu0
        %v504 = vadd.f32 %v402, %v503
        %505 = vmatmul.f32.gmra.mxu0 %v420
        %v506 = vpop.f32.mrf.mxu0
        %v507 = vadd.f32 %v407, %v506
        %508 = vdwg.mxu0
        %509 = vmatpush.msra.mxu0 0.0
        %510 = vmatpush.msra.mxu0 0.0
        %511 = vmatpush.msra.mxu0 0.0
        %512 = vmatpush.msra.mxu0 0.0
        %513 = vmatpush.msra.mxu0 0.0
        %514 = vmatpush.msra.mxu0 0.0
        %515 = vmatpush.msra.mxu0 0.0
        %516 = vmatpush.msra.mxu0 0.0
        %517 = vmatpush.msra.mxu0 0.0
        %518 = vmatpush.msra.mxu0 0.0
        %519 = vmatpush.msra.mxu0 0.0
        %520 = vmatpush.msra.mxu0 0.0
        %521 = vmatpush.msra.mxu0 0.0
        %522 = vmatpush.msra.mxu0 0.0
        %523 = vmatpush.msra.mxu0 %v384
        %524 = vmatpush.msra.mxu0 %v380
        %525 = vmatmul.f32.gmra.mxu0 %v411
        %v526 = vpop.f32.mrf.mxu0
        %v527 = vadd.f32 %v392, %v526
        %528 = vmatmul.f32.gmra.mxu0 %v414
        %v529 = vpop.f32.mrf.mxu0
        %v530 = vadd.f32 %v397, %v529
        %531 = vmatmul.f32.gmra.mxu0 %v417
        %v532 = vpop.f32.mrf.mxu0
        %v533 = vadd.f32 %v402, %v532
        %534 = vmatmul.f32.gmra.mxu0 %v420
        %v535 = vpop.f32.mrf.mxu0
        %v536 = vadd.f32 %v407, %v535
        %537 = vdwg.mxu0
        %v538 = vmax.f32 %v440, 0.0
        %v539 = vmax.f32 %v469, 0.0
        %v540 = vmax.f32 %v498, 0.0
        %v541 = vmax.f32 %v527, 0.0
        %v542 = vmax.f32 %v443, 0.0
        %v543 = vmax.f32 %v472, 0.0
        %v544 = vmax.f32 %v501, 0.0
        %v545 = vmax.f32 %v530, 0.0
        %v546 = vmax.f32 %v446, 0.0
        %v547 = vmax.f32 %v475, 0.0
        %v548 = vmax.f32 %v504, 0.0
        %v549 = vmax.f32 %v533, 0.0
        %v550 = vmax.f32 %v449, 0.0
        %v551 = vmax.f32 %v478, 0.0
        %v552 = vmax.f32 %v507, 0.0
        %v553 = vmax.f32 %v536, 0.0
        %v554 = vld [vmem:[%s3] sm:$0xff]
        %v555 = vld [vmem:[%s3 + $0x8] sm:$0xff]
        %557 = vset.pattern.permute.xlu0 0
        %558 = vperm.xlu0 %557, %v263
        %v559 = vpop.permute.xlu0 %558
        %562 = vset.pattern.permute.xlu0 0
        %563 = vperm.xlu0 %562, %v264
        %v564 = vpop.permute.xlu0 %563
        %vm566 = vcmask 261120
        %v568 = vsel %vm566, %v554, 0
        %v571 = vsel %vm566, %v555, 0
        %573 = vmatpush.msra.mxu0 0.0
        %574 = vmatpush.msra.mxu0 0.0
        %575 = vmatpush.msra.mxu0 0.0
        %576 = vmatpush.msra.mxu0 0.0
        %577 = vmatpush.msra.mxu0 0.0
        %578 = vmatpush.msra.mxu0 0.0
        %579 = vmatpush.msra.mxu0 0.0
        %580 = vmatpush.msra.mxu0 0.0
        %581 = vmatpush.msra.mxu0 0.0
        %582 = vmatpush.msra.mxu0 0.0
        %583 = vmatpush.msra.mxu0 0.0
        %584 = vmatpush.msra.mxu0 0.0
        %585 = vmatpush.msra.mxu0 %v550
        %586 = vmatpush.msra.mxu0 %v546
        %587 = vmatpush.msra.mxu0 %v542
        %588 = vmatpush.msra.mxu0 %v538
        %589 = vmatmul.f32.gmra.mxu0 %v568
        %v590 = vpop.f32.mrf.mxu0
        %v591 = vadd.f32 %v559, %v590
        %592 = vmatmul.f32.gmra.mxu0 %v571
        %v593 = vpop.f32.mrf.mxu0
        %v594 = vadd.f32 %v564, %v593
        %595 = vdwg.mxu0
        %596 = vmatpush.msra.mxu0 0.0
        %597 = vmatpush.msra.mxu0 0.0
        %598 = vmatpush.msra.mxu0 0.0
        %599 = vmatpush.msra.mxu0 0.0
        %600 = vmatpush.msra.mxu0 0.0
        %601 = vmatpush.msra.mxu0 0.0
        %602 = vmatpush.msra.mxu0 0.0
        %603 = vmatpush.msra.mxu0 0.0
        %604 = vmatpush.msra.mxu0 0.0
        %605 = vmatpush.msra.mxu0 0.0
        %606 = vmatpush.msra.mxu0 0.0
        %607 = vmatpush.msra.mxu0 0.0
        %608 = vmatpush.msra.mxu0 %v551
        %609 = vmatpush.msra.mxu0 %v547
        %610 = vmatpush.msra.mxu0 %v543
        %611 = vmatpush.msra.mxu0 %v539
        %612 = vmatmul.f32.gmra.mxu0 %v568
        %v613 = vpop.f32.mrf.mxu0
        %v614 = vadd.f32 %v559, %v613
        %615 = vmatmul.f32.gmra.mxu0 %v571
        %v616 = vpop.f32.mrf.mxu0
        %v617 = vadd.f32 %v564, %v616
        %618 = vdwg.mxu0
        %619 = vmatpush.msra.mxu0 0.0
        %620 = vmatpush.msra.mxu0 0.0
        %621 = vmatpush.msra.mxu0 0.0
        %622 = vmatpush.msra.mxu0 0.0
        %623 = vmatpush.msra.mxu0 0.0
        %624 = vmatpush.msra.mxu0 0.0
        %625 = vmatpush.msra.mxu0 0.0
        %626 = vmatpush.msra.mxu0 0.0
        %627 = vmatpush.msra.mxu0 0.0
        %628 = vmatpush.msra.mxu0 0.0
        %629 = vmatpush.msra.mxu0 0.0
        %630 = vmatpush.msra.mxu0 0.0
        %631 = vmatpush.msra.mxu0 %v552
        %632 = vmatpush.msra.mxu0 %v548
        %633 = vmatpush.msra.mxu0 %v544
        %634 = vmatpush.msra.mxu0 %v540
        %635 = vmatmul.f32.gmra.mxu0 %v568
        %v636 = vpop.f32.mrf.mxu0
        %v637 = vadd.f32 %v559, %v636
        %638 = vmatmul.f32.gmra.mxu0 %v571
        %v639 = vpop.f32.mrf.mxu0
        %v640 = vadd.f32 %v564, %v639
        %641 = vdwg.mxu0
        %642 = vmatpush.msra.mxu0 0.0
        %643 = vmatpush.msra.mxu0 0.0
        %644 = vmatpush.msra.mxu0 0.0
        %645 = vmatpush.msra.mxu0 0.0
        %646 = vmatpush.msra.mxu0 0.0
        %647 = vmatpush.msra.mxu0 0.0
        %648 = vmatpush.msra.mxu0 0.0
        %649 = vmatpush.msra.mxu0 0.0
        %650 = vmatpush.msra.mxu0 0.0
        %651 = vmatpush.msra.mxu0 0.0
        %652 = vmatpush.msra.mxu0 0.0
        %653 = vmatpush.msra.mxu0 0.0
        %654 = vmatpush.msra.mxu0 %v553
        %655 = vmatpush.msra.mxu0 %v549
        %656 = vmatpush.msra.mxu0 %v545
        %657 = vmatpush.msra.mxu0 %v541
        %658 = vmatmul.f32.gmra.mxu0 %v568
        %v659 = vpop.f32.mrf.mxu0
        %v660 = vadd.f32 %v559, %v659
        %661 = vmatmul.f32.gmra.mxu0 %v571
        %v662 = vpop.f32.mrf.mxu0
        %v663 = vadd.f32 %v564, %v662
        %664 = vdwg.mxu0
        %v665 = vmax.f32 %v591, 0.0
        %v666 = vmax.f32 %v614, 0.0
        %v667 = vmax.f32 %v637, 0.0
        %v668 = vmax.f32 %v660, 0.0
        %v669 = vmax.f32 %v594, 0.0
        %v670 = vmax.f32 %v617, 0.0
        %v671 = vmax.f32 %v640, 0.0
        %v672 = vmax.f32 %v663, 0.0
        %v673 = vld [vmem:[%s4] sm:$0xff]
        %675 = vset.pattern.permute.xlu0 0
        %676 = vperm.xlu0 %675, %v265
        %v677 = vpop.permute.xlu0 %676
        %v680 = vsel %vm409, %v673, 0
        %682 = vmatpush.msra.mxu0 0.0
        %683 = vmatpush.msra.mxu0 0.0
        %684 = vmatpush.msra.mxu0 0.0
        %685 = vmatpush.msra.mxu0 0.0
        %686 = vmatpush.msra.mxu0 0.0
        %687 = vmatpush.msra.mxu0 0.0
        %688 = vmatpush.msra.mxu0 0.0
        %689 = vmatpush.msra.mxu0 0.0
        %690 = vmatpush.msra.mxu0 0.0
        %691 = vmatpush.msra.mxu0 0.0
        %692 = vmatpush.msra.mxu0 0.0
        %693 = vmatpush.msra.mxu0 0.0
        %694 = vmatpush.msra.mxu0 0.0
        %695 = vmatpush.msra.mxu0 0.0
        %696 = vmatpush.msra.mxu0 %v669
        %697 = vmatpush.msra.mxu0 %v665
        %698 = vmatmul.f32.gmra.mxu0 %v680
        %v699 = vpop.f32.mrf.mxu0
        %v700 = vadd.f32 %v677, %v699
        %701 = vdwg.mxu0
        %702 = vmatpush.msra.mxu0 0.0
        %703 = vmatpush.msra.mxu0 0.0
        %704 = vmatpush.msra.mxu0 0.0
        %705 = vmatpush.msra.mxu0 0.0
        %706 = vmatpush.msra.mxu0 0.0
        %707 = vmatpush.msra.mxu0 0.0
        %708 = vmatpush.msra.mxu0 0.0
        %709 = vmatpush.msra.mxu0 0.0
        %710 = vmatpush.msra.mxu0 0.0
        %711 = vmatpush.msra.mxu0 0.0
        %712 = vmatpush.msra.mxu0 0.0
        %713 = vmatpush.msra.mxu0 0.0
        %714 = vmatpush.msra.mxu0 0.0
        %715 = vmatpush.msra.mxu0 0.0
        %716 = vmatpush.msra.mxu0 %v670
        %717 = vmatpush.msra.mxu0 %v666
        %718 = vmatmul.f32.gmra.mxu0 %v680
        %v719 = vpop.f32.mrf.mxu0
        %v720 = vadd.f32 %v677, %v719
        %721 = vdwg.mxu0
        %722 = vmatpush.msra.mxu0 0.0
        %723 = vmatpush.msra.mxu0 0.0
        %724 = vmatpush.msra.mxu0 0.0
        %725 = vmatpush.msra.mxu0 0.0
        %726 = vmatpush.msra.mxu0 0.0
        %727 = vmatpush.msra.mxu0 0.0
        %728 = vmatpush.msra.mxu0 0.0
        %729 = vmatpush.msra.mxu0 0.0
        %730 = vmatpush.msra.mxu0 0.0
        %731 = vmatpush.msra.mxu0 0.0
        %732 = vmatpush.msra.mxu0 0.0
        %733 = vmatpush.msra.mxu0 0.0
        %734 = vmatpush.msra.mxu0 0.0
        %735 = vmatpush.msra.mxu0 0.0
        %736 = vmatpush.msra.mxu0 %v671
        %737 = vmatpush.msra.mxu0 %v667
        %738 = vmatmul.f32.gmra.mxu0 %v680
        %v739 = vpop.f32.mrf.mxu0
        %v740 = vadd.f32 %v677, %v739
        %741 = vdwg.mxu0
        %742 = vmatpush.msra.mxu0 0.0
        %743 = vmatpush.msra.mxu0 0.0
        %744 = vmatpush.msra.mxu0 0.0
        %745 = vmatpush.msra.mxu0 0.0
        %746 = vmatpush.msra.mxu0 0.0
        %747 = vmatpush.msra.mxu0 0.0
        %748 = vmatpush.msra.mxu0 0.0
        %749 = vmatpush.msra.mxu0 0.0
        %750 = vmatpush.msra.mxu0 0.0
        %751 = vmatpush.msra.mxu0 0.0
        %752 = vmatpush.msra.mxu0 0.0
        %753 = vmatpush.msra.mxu0 0.0
        %754 = vmatpush.msra.mxu0 0.0
        %755 = vmatpush.msra.mxu0 0.0
        %756 = vmatpush.msra.mxu0 %v672
        %757 = vmatpush.msra.mxu0 %v668
        %758 = vmatmul.f32.gmra.mxu0 %v680
        %v759 = vpop.f32.mrf.mxu0
        %v760 = vadd.f32 %v677, %v759
        %761 = vdwg.mxu0
        %762 = vst [vmem:[%s245] sm:$0xff] %v700
        %763 = vst [vmem:[%s245 + $0x8] sm:$0xff] %v720
        %764 = vst [vmem:[%s245 + $0x10] sm:$0xff] %v740
        %765 = vst [vmem:[%s245 + $0x18] sm:$0xff] %v760
        %s766 = sand.u32 %s159, 1
        %s767 = scalar_lea.sflag [#allocation3], %s766
        %s768 = sand.u32 %s159, 1
        %s769 = smul.addr %s768, 32
        %s770 = scalar_lea.vmem [#allocation2], %s769
        // Predicated region
        $region45: #{tpu_custom_call.1} parent=43 // pred_check
          %p771 = pneg %p169
        $region46: #{tpu_custom_call.1} parent=43 // pred_check_branch
          %773 = sbr.rel (%p771) target = $region48
        $region47: #{tpu_custom_call.1} parent=43 // pred_region
          %s774 = smul.u32 4, %s20
          %776 = vsyncadd %s767, 0
          %s777 = smul.addr %s774, 8
          %s778 = scalar_lea.hbm %s6, %s777
          %s780 = sshll.u32 %s770, 4
          %s781 = int_to_ptr.vmem [resolvable:$true] %s780
          %s782 = sshll.u32 %s778, 4
          %s783 = int_to_ptr.hbm [resolvable:$true] %s782
          %785 = dma.vmem_to_hbm [thread:$0]  %s781, 512, %s783, %s767
        $region48: #{tpu_custom_call.1} parent=43 // pred_fallthru
          _
      $region44: #{tpu_custom_call.1} parent=5 // pred_fallthru
        _
      %p786 = scmp.le.s32.totalorder 2, %s15
      // Predicated region
      $region49: #{tpu_custom_call.1} parent=5 // pred_check
        %p787 = pneg %p786
      $region50: #{tpu_custom_call.1} parent=5 // pred_check_branch
        %789 = sbr.rel (%p787) target = $region52
      $region51: #{tpu_custom_call.1} parent=5 // pred_region
        %s790 = ssub.s32 %s15, 2
        // Predicated region
        $region53: #{tpu_custom_call.1} parent=51 // pred_check
          %p791 = pneg %p175
        $region54: #{tpu_custom_call.1} parent=51 // pred_check_branch
          %793 = sbr.rel (%p791) target = $region56
        $region55: #{tpu_custom_call.1} parent=51 // pred_region
          %s794 = sand.u32 %s160, 1
          %s795 = scalar_lea.sflag [#allocation3], %s794
          %s796 = sand.u32 %s160, 1
          %s797 = smul.addr %s796, 32
          %s798 = scalar_lea.vmem [#allocation2], %s797
          %800 = dma.done %s795, 512
        $region56: #{tpu_custom_call.1} parent=51 // pred_fallthru
          _
      $region52: #{tpu_custom_call.1} parent=5 // pred_fallthru
        _
    $region6: #{tpu_custom_call.1} parent=1 // loop_footer
      %s19 = sadd.s32 1, %s15
    $region7: #{tpu_custom_call.1} parent=1 // loop_footer_branch
      %14 = sbr.rel target = $region3
    $region8: #{tpu_custom_call.1} parent=1 // loop_exit
      _
    %801 = vsyncpa [#allocation3], 1
    %s802 = scalar_lea.sflag [#allocation3], 1
    %803 = vsyncpa %s802, 1

</llo_original>
